<compile_context>
chip_gen: v7x
topology: tpu7x:2x2x1
jax: 0.10.0
libtpu: 0.0.40
codegen_flags: <defaults>
</compile_context>

<pallas_src>
import functools

import jax
import jax.numpy as jnp
from jax.experimental import pallas as pl
from jax.experimental.pallas import tpu as pltpu


# ---------------------------------------------------------------------------
# Kernels
# ---------------------------------------------------------------------------

def _se_kernel(x_ref, w1t_ref, b1_ref, w2t_ref, b2_ref, o_ref, *, inv_hw):
    """Single-pass SE: pool -> FC1 -> ReLU -> FC2 -> sigmoid -> scale.

    x_ref/o_ref: (TB, C, HW); w1t_ref: (C, Hd); b1_ref: (1, Hd);
    w2t_ref: (Hd, C); b2_ref: (1, C).
    """
    x = x_ref[...]                                               # input dtype

    # Squeeze: exact global average pool (f32 accumulation over the lane axis).
    pooled = jnp.sum(x, axis=-1, dtype=jnp.float32) * inv_hw     # (TB, C)

    # Excitation MLP in f32; M = TB rows through the MXU per grid step.
    h = jnp.dot(pooled, w1t_ref[...], preferred_element_type=jnp.float32)
    h = jnp.maximum(h + b1_ref[...], 0.0)                        # (TB, Hd)
    y = jnp.dot(h, w2t_ref[...], preferred_element_type=jnp.float32)
    y = jax.nn.sigmoid(y + b2_ref[...])                          # (TB, C) f32

    # Excite: multiply in f32 (matches the PyTorch reference), cast on store.
    o_ref[...] = (x * y[:, :, None]).astype(o_ref.dtype)


def _se_gate_kernel(x_ref, w1t_ref, b1_ref, w2t_ref, b2_ref, gate_ref, acc_ref,
                    *, inv_hw, hw, thw):
    """Two-phase fallback, phase 0: accumulate the pooled sum over HW tiles,
    emit the sigmoid gate on the last tile.  gate_ref: (1, 1, C) f32."""
    s = pl.program_id(1)

    @pl.when(s == 0)
    def _():
        acc_ref[...] = jnp.zeros_like(acc_ref)

    x = x_ref[...]                                               # (1, C, THW)
    # Mask the tail of the last HW tile so the mean stays exact.
    lane = jax.lax.broadcasted_iota(jnp.int32, x.shape, 2)
    valid = (s * thw + lane) < hw
    x = jnp.where(valid, x, jnp.zeros((), x.dtype))
    acc_ref[...] += jnp.sum(x, axis=-1, dtype=jnp.float32)       # (1, C)

    @pl.when(s == pl.num_programs(1) - 1)
    def _():
        pooled = acc_ref[...] * inv_hw                           # (1, C)
        # TODO(synk): M=1 matmuls waste the MXU, but they run once per batch
        # element per full HW stream and hide behind the x DMA.
        h = jnp.dot(pooled, w1t_ref[...], preferred_element_type=jnp.float32)
        h = jnp.maximum(h + b1_ref[...], 0.0)
        y = jnp.dot(h, w2t_ref[...], preferred_element_type=jnp.float32)
        y = jax.nn.sigmoid(y + b2_ref[...])                      # (1, C)
        gate_ref[...] = y[:, None, :]                            # (1, 1, C)


def _se_scale_kernel(x_ref, gate_ref, o_ref):
    """Two-phase fallback, phase 1: apply the per-channel gate.
    x_ref/o_ref: (1, C, THW); gate_ref: (1, C, 1) f32."""
    o_ref[...] = (x_ref[...] * gate_ref[...]).astype(o_ref.dtype)


# ---------------------------------------------------------------------------
# Wrapper
# ---------------------------------------------------------------------------

_TARGET_BLOCK_BYTES = 4 << 20      # aim for MiB-scale blocks (HBM roofline)


def _vmem_capacity_bytes():
    try:
        cap = getattr(pltpu.get_tpu_info(), "vmem_capacity_bytes", None)
        if cap:
            return int(cap)
    except Exception:
        pass
    return 64 << 20                # conservative (v7x-sized) fallback


def _batch_axis_semantics(num_batch_tiles):
    """CORE_PARALLEL on v7x (2 TensorCores/chip); plain PARALLEL elsewhere."""
    try:
        kind = jax.devices()[0].device_kind.lower()
    except Exception:
        kind = ""
    if "v7" in kind and num_batch_tiles >= 2:
        return pltpu.CORE_PARALLEL
    return pltpu.PARALLEL


@functools.partial(jax.jit, static_argnames=("hw_tile",))
def se_layer(x_nchw, w1, b1, w2, b2, *, hw_tile=None):
    """SELayer forward.  x_nchw: (B, C, H, W); w1: (C//r, C), b1: (C//r,),
    w2: (C, C//r), b2: (C,).  `hw_tile` forces the two-phase HW-tiled path
    (used for testing and for very large feature maps)."""
    B, C, H, W = x_nchw.shape
    hidden = w1.shape[0]
    HW = H * W
    itemsize = x_nchw.dtype.itemsize
    inv_hw = float(1.0 / HW)

    x = x_nchw.reshape(B, C, HW)

    # Pre-transposed f32 weights (plain row-major matmuls in-kernel); biases
    # lifted to (1, N) for TPU-friendly layouts.  All stay VMEM-resident.
    w1t = jnp.transpose(w1).astype(jnp.float32)        # (C, hidden)
    w2t = jnp.transpose(w2).astype(jnp.float32)        # (hidden, C)
    b1_2d = b1.reshape(1, hidden).astype(jnp.float32)
    b2_2d = b2.reshape(1, C).astype(jnp.float32)
    weight_bytes = 4 * (w1t.size + w2t.size + b1_2d.size + b2_2d.size)

    budget = int(0.75 * _vmem_capacity_bytes())

    # Per batch-row VMEM cost in the single-pass path: double-buffered input
    # and output blocks plus one f32 intermediate for the f32 excite multiply.
    per_batch_bytes = C * HW * itemsize
    bytes_per_row = 4 * per_batch_bytes + C * HW * 4
    avail = budget - 2 * weight_bytes - (2 << 20)
    max_tb_fit = avail // bytes_per_row if avail > 0 else 0

    if hw_tile is None and max_tb_fit >= 1:
        # ------------------------- single-pass path -------------------------
        tb = int(min(B, max_tb_fit,
                     max(1, _TARGET_BLOCK_BYTES // per_batch_bytes)))
        nb = pl.cdiv(B, tb)   # partial last batch block: OOB rows are dropped

        vmem_need = tb * bytes_per_row + 2 * weight_bytes + (1 << 20)
        vmem_limit = int(min(budget, max(vmem_need, 16 << 20)))

        cost = pl.CostEstimate(
            flops=int(2 * B * C * HW + 4 * B * C * hidden),
            transcendentals=int(B * C),
            bytes_accessed=int(2 * B * C * HW * itemsize + weight_bytes),
        )

        out = pl.pallas_call(
            functools.partial(_se_kernel, inv_hw=inv_hw),
            out_shape=jax.ShapeDtypeStruct((B, C, HW), x.dtype),
            grid=(nb,),
            in_specs=[
                pl.BlockSpec((tb, C, HW), lambda b: (b, 0, 0)),   # x slab
                pl.BlockSpec((C, hidden), lambda b: (0, 0)),      # w1^T
                pl.BlockSpec((1, hidden), lambda b: (0, 0)),      # b1
                pl.BlockSpec((hidden, C), lambda b: (0, 0)),      # w2^T
                pl.BlockSpec((1, C), lambda b: (0, 0)),           # b2
            ],
            out_specs=pl.BlockSpec((tb, C, HW), lambda b: (b, 0, 0)),
            compiler_params=pltpu.CompilerParams(
                dimension_semantics=(_batch_axis_semantics(nb),),
                vmem_limit_bytes=vmem_limit,
            ),
            cost_estimate=cost,
        )(x, w1t, b1_2d, w2t, b2_2d)
        return out.reshape(B, C, H, W)

    # --------------------------- two-phase path -----------------------------
    # For slabs that do not fit VMEM even at TB=1 (mainly v7x, 64 MiB), stream
    # HW tiles twice: phase 0 computes the gate, phase 1 applies it.
    if hw_tile is not None:
        thw = int(hw_tile)
    else:
        thw = max(128, ((_TARGET_BLOCK_BYTES // (C * itemsize)) // 128) * 128)
        if HW >= 128:
            thw = min(thw, (HW // 128) * 128)
    ns = pl.cdiv(HW, thw)
    nb = B

    tile_bytes = C * thw * itemsize
    vmem_limit = int(min(budget,
                         max(6 * tile_bytes + 2 * weight_bytes + (2 << 20),
                             16 << 20)))
    params = pltpu.CompilerParams(
        dimension_semantics=(_batch_axis_semantics(nb), pltpu.ARBITRARY),
        vmem_limit_bytes=vmem_limit,
    )

    gate = pl.pallas_call(
        functools.partial(_se_gate_kernel, inv_hw=inv_hw, hw=HW, thw=thw),
        out_shape=jax.ShapeDtypeStruct((B, 1, C), jnp.float32),
        grid=(nb, ns),
        in_specs=[
            pl.BlockSpec((1, C, thw), lambda b, s: (b, 0, s)),
            pl.BlockSpec((C, hidden), lambda b, s: (0, 0)),
            pl.BlockSpec((1, hidden), lambda b, s: (0, 0)),
            pl.BlockSpec((hidden, C), lambda b, s: (0, 0)),
            pl.BlockSpec((1, C), lambda b, s: (0, 0)),
        ],
        out_specs=pl.BlockSpec((1, 1, C), lambda b, s: (b, 0, 0)),
        scratch_shapes=[pltpu.VMEM((1, C), jnp.float32)],
        compiler_params=params,
        cost_estimate=pl.CostEstimate(
            flops=int(B * C * HW + 4 * B * C * hidden),
            transcendentals=int(B * C),
            bytes_accessed=int(B * C * HW * itemsize + weight_bytes),
        ),
    )(x, w1t, b1_2d, w2t, b2_2d)

    gate_cf = jnp.transpose(gate, (0, 2, 1))             # (B, C, 1) -- tiny

    out = pl.pallas_call(
        _se_scale_kernel,
        out_shape=jax.ShapeDtypeStruct((B, C, HW), x.dtype),
        grid=(nb, ns),
        in_specs=[
            pl.BlockSpec((1, C, thw), lambda b, s: (b, 0, s)),
            pl.BlockSpec((1, C, 1), lambda b, s: (b, 0, 0)),
        ],
        out_specs=pl.BlockSpec((1, C, thw), lambda b, s: (b, 0, s)),
        compiler_params=params,
        cost_estimate=pl.CostEstimate(
            flops=int(B * C * HW),
            transcendentals=0,
            bytes_accessed=int(2 * B * C * HW * itemsize + 4 * B * C),
        ),
    )(x, gate_cf)
    return out.reshape(B, C, H, W)


# ---------------------------------------------------------------------------
# Reference + test
# ---------------------------------------------------------------------------

def _reference(x, w1, b1, w2, b2):
    """Pure-JAX reference matching the PyTorch forward."""
    pooled = jnp.mean(x.astype(jnp.float32), axis=(2, 3))        # (B, C)
    h = jnp.maximum(pooled @ w1.T + b1, 0.0)                     # (B, C//r)
    y = jax.nn.sigmoid(h @ w2.T + b2)                            # (B, C)
    return (x.astype(jnp.float32) * y[:, :, None, None]).astype(x.dtype)


if __name__ == "__main__":
    # Module config: channel must be >= reduction so C//reduction >= 1.
    B, C, reduction = 2, 32, 16
    hidden = C // reduction

    key = jax.random.PRNGKey(0)
    kx, k1, k2, k3, k4, kx2 = jax.random.split(key, 6)

    w1 = jax.random.normal(k1, (hidden, C), dtype=jnp.float32) * 0.1
    b1 = jax.random.normal(k2, (hidden,), dtype=jnp.float32) * 0.1
    w2 = jax.random.normal(k3, (C, hidden), dtype=jnp.float32) * 0.1
    b2 = jax.random.normal(k4, (C,), dtype=jnp.float32) * 0.1

    # Case 1: f32, 16x16 (HW = 256), single-pass batch-tiled path.
    x = jax.random.normal(kx, (B, C, 16, 16), dtype=jnp.float32)
    out = se_layer(x, w1, b1, w2, b2)
    jax.block_until_ready(out)
    ref = _reference(x, w1, b1, w2, b2)
    assert out.shape == x.shape
    assert jnp.allclose(out, ref, atol=1e-5, rtol=1e-5), "mismatch (f32 16x16)"

    # Case 2: f32, 14x14 (HW = 196, not a 128-multiple) -- no host pad/slice,
    # masked tail store inside the kernel.
    x2 = jax.random.normal(kx2, (B, C, 14, 14), dtype=jnp.float32)
    out2 = se_layer(x2, w1, b1, w2, b2)
    jax.block_until_ready(out2)
    ref2 = _reference(x2, w1, b1, w2, b2)
    assert out2.shape == x2.shape
    assert jnp.allclose(out2, ref2, atol=1e-5, rtol=1e-5), "mismatch (f32 14x14)"

    # Case 3: bf16 input -- gate multiply happens in f32 and is cast once,
    # matching the reference ordering.
    xb = x.astype(jnp.bfloat16)
    outb = se_layer(xb, w1, b1, w2, b2)
    jax.block_until_ready(outb)
    refb = _reference(xb, w1, b1, w2, b2)
    assert outb.dtype == jnp.bfloat16
    assert jnp.allclose(outb.astype(jnp.float32), refb.astype(jnp.float32),
                        atol=1e-2, rtol=1e-2), "mismatch (bf16 16x16)"

    # Case 4: force the two-phase HW-tiled fallback (phase 0 gate + phase 1
    # scale) on the 16x16 input with 128-wide HW tiles.
    out4 = se_layer(x, w1, b1, w2, b2, hw_tile=128)
    jax.block_until_ready(out4)
    assert jnp.allclose(out4, ref, atol=1e-5, rtol=1e-5), "mismatch (two-phase)"

    print("KERNEL_OK")
</pallas_src>

<mosaic_0001>
module attributes {stable_mosaic.version = 11 : i64} {
  func.func @_se_kernel(%arg0: i32, %arg1: memref<2x32x256xf32, #tpu.memory_space<vmem>>, %arg2: memref<32x2xf32, #tpu.memory_space<vmem>>, %arg3: memref<1x2xf32, #tpu.memory_space<vmem>>, %arg4: memref<2x32xf32, #tpu.memory_space<vmem>>, %arg5: memref<1x32xf32, #tpu.memory_space<vmem>>, %arg6: memref<2x32x256xf32, #tpu.memory_space<vmem>>) attributes {dimension_semantics = [#tpu.dimension_semantics<parallel>], iteration_bounds = array<i64: 1>, scalar_prefetch = 0 : i64, scratch_operands = 0 : i64, tpu.core_type = #tpu.core_type<tc>, window_params = [{transform_indices = @transform_0, window_bounds = array<i64: 2, 32, 256>}, {pipeline_mode = #tpu.pipeline_mode<synchronous>, transform_indices = @transform_1, window_bounds = array<i64: 32, 2>}, {pipeline_mode = #tpu.pipeline_mode<synchronous>, transform_indices = @transform_2, window_bounds = array<i64: 1, 2>}, {pipeline_mode = #tpu.pipeline_mode<synchronous>, transform_indices = @transform_3, window_bounds = array<i64: 2, 32>}, {pipeline_mode = #tpu.pipeline_mode<synchronous>, transform_indices = @transform_4, window_bounds = array<i64: 1, 32>}, {transform_indices = @transform_5, window_bounds = array<i64: 2, 32, 256>}]} {
    %c0 = arith.constant 0 : index
    %c0_0 = arith.constant 0 : index
    %c0_1 = arith.constant 0 : index
    %0 = vector.load %arg1[%c0, %c0_0, %c0_1] : memref<2x32x256xf32, #tpu.memory_space<vmem>>, vector<2x32x256xf32>
    %cst = arith.constant dense<0.000000e+00> : vector<2x32xf32>
    %1 = vector.multi_reduction <add>, %0, %cst [2] : vector<2x32x256xf32> to vector<2x32xf32>
    %cst_2 = arith.constant 3.906250e-03 : f32
    %2 = vector.broadcast %cst_2 : f32 to vector<2x32xf32>
    %3 = arith.mulf %1, %2 : vector<2x32xf32>
    %c0_3 = arith.constant 0 : index
    %c0_4 = arith.constant 0 : index
    %4 = vector.load %arg2[%c0_3, %c0_4] : memref<32x2xf32, #tpu.memory_space<vmem>>, vector<32x2xf32>
    %cst_5 = arith.constant dense<0.000000e+00> : vector<2x2xf32>
    %5 = tpu.matmul %3, %4, %cst_5 {dimension_numbers = #tpu.dot_dimension_numbers<[1], [0], [0], [1], [0, 0, 1, 1], [], []>} : vector<2x32xf32>, vector<32x2xf32>, vector<2x2xf32> -> vector<2x2xf32>
    %c0_6 = arith.constant 0 : index
    %c0_7 = arith.constant 0 : index
    %6 = vector.load %arg3[%c0_6, %c0_7] : memref<1x2xf32, #tpu.memory_space<vmem>>, vector<1x2xf32>
    %7 = vector.broadcast %6 : vector<1x2xf32> to vector<2x2xf32>
    %8 = arith.addf %5, %7 : vector<2x2xf32>
    %cst_8 = arith.constant 0.000000e+00 : f32
    %9 = vector.broadcast %cst_8 : f32 to vector<2x2xf32>
    %10 = arith.maximumf %8, %9 : vector<2x2xf32>
    %c0_9 = arith.constant 0 : index
    %c0_10 = arith.constant 0 : index
    %11 = vector.load %arg4[%c0_9, %c0_10] : memref<2x32xf32, #tpu.memory_space<vmem>>, vector<2x32xf32>
    %cst_11 = arith.constant dense<0.000000e+00> : vector<2x32xf32>
    %12 = tpu.matmul %10, %11, %cst_11 {dimension_numbers = #tpu.dot_dimension_numbers<[1], [0], [0], [1], [0, 0, 1, 1], [], []>} : vector<2x2xf32>, vector<2x32xf32>, vector<2x32xf32> -> vector<2x32xf32>
    %c0_12 = arith.constant 0 : index
    %c0_13 = arith.constant 0 : index
    %13 = vector.load %arg5[%c0_12, %c0_13] : memref<1x32xf32, #tpu.memory_space<vmem>>, vector<1x32xf32>
    %14 = vector.broadcast %13 : vector<1x32xf32> to vector<2x32xf32>
    %15 = arith.addf %12, %14 : vector<2x32xf32>
    %16 = arith.negf %15 : vector<2x32xf32>
    %17 = math.exp %16 : vector<2x32xf32>
    %cst_14 = arith.constant 1.000000e+00 : f32
    %18 = vector.broadcast %cst_14 : f32 to vector<2x32xf32>
    %19 = arith.addf %18, %17 : vector<2x32xf32>
    %20 = arith.divf %18, %19 : vector<2x32xf32>
    %21 = vector.shape_cast %20 : vector<2x32xf32> to vector<2x32x1xf32>
    %22 = vector.broadcast %21 : vector<2x32x1xf32> to vector<2x32x256xf32>
    %23 = arith.mulf %0, %22 : vector<2x32x256xf32>
    %c0_15 = arith.constant 0 : index
    %c0_16 = arith.constant 0 : index
    %c0_17 = arith.constant 0 : index
    %24 = vector.load %arg6[%c0_15, %c0_16, %c0_17] : memref<2x32x256xf32, #tpu.memory_space<vmem>>, vector<2x32x256xf32>
    tpu.vector_store %arg6[%c0_15, %c0_16, %c0_17], %23 {strides = array<i32>} : memref<2x32x256xf32, #tpu.memory_space<vmem>>, vector<2x32x256xf32>,
    return
  }
  func.func @transform_0(%arg0: i32) -> (i32, i32, i32) {
    %c0_i32 = arith.constant 0 : i32
    %c0_i32_0 = arith.constant 0 : i32
    %c0_i32_1 = arith.constant 0 : i32
    return %arg0, %c0_i32, %c0_i32_0 : i32, i32, i32
  }
  func.func @transform_1(%arg0: i32) -> (i32, i32) {
    %c0_i32 = arith.constant 0 : i32
    %c0_i32_0 = arith.constant 0 : i32
    %c0_i32_1 = arith.constant 0 : i32
    return %c0_i32, %c0_i32_0 : i32, i32
  }
  func.func @transform_2(%arg0: i32) -> (i32, i32) {
    %c0_i32 = arith.constant 0 : i32
    %c0_i32_0 = arith.constant 0 : i32
    %c0_i32_1 = arith.constant 0 : i32
    return %c0_i32, %c0_i32_0 : i32, i32
  }
  func.func @transform_3(%arg0: i32) -> (i32, i32) {
    %c0_i32 = arith.constant 0 : i32
    %c0_i32_0 = arith.constant 0 : i32
    %c0_i32_1 = arith.constant 0 : i32
    return %c0_i32, %c0_i32_0 : i32, i32
  }
  func.func @transform_4(%arg0: i32) -> (i32, i32) {
    %c0_i32 = arith.constant 0 : i32
    %c0_i32_0 = arith.constant 0 : i32
    %c0_i32_1 = arith.constant 0 : i32
    return %c0_i32, %c0_i32_0 : i32, i32
  }
  func.func @transform_5(%arg0: i32) -> (i32, i32, i32) {
    %c0_i32 = arith.constant 0 : i32
    %c0_i32_0 = arith.constant 0 : i32
    %c0_i32_1 = arith.constant 0 : i32
    return %arg0, %c0_i32, %c0_i32_0 : i32, i32, i32
  }
}

</mosaic_0001>

<llo_original>
// kernel: se_layer.1
$region0: #{se_layer.1}
  #allocation0 [shape = 'u32[]', space=smem, size = 0x4, offset = 0x4, fixed_abs, tag = 'smem constant byte address 0x4 - core index']
  #allocation1 [shape = 'u32[144,128]{1,0:T(1,128)}', space=vmem, size = 0x12000, scoped, tag = 'internal scratch']
  %s0 = inlined_call_operand.vmem [shape: f32[2,32,256], index: 0, kind: input, shape index: {}]
  %s1 = inlined_call_operand.vmem [shape: f32[32,2], index: 1, kind: input, shape index: {}]
  %s2 = inlined_call_operand.vmem [shape: f32[1,2], index: 2, kind: input, shape index: {}]
  %s3 = inlined_call_operand.vmem [shape: f32[2,32], index: 3, kind: input, shape index: {}]
  %s4 = inlined_call_operand.vmem [shape: f32[1,32], index: 4, kind: input, shape index: {}]
  %s5 = inlined_call_operand.vmem [shape: f32[2,32,256], index: 5, kind: output, shape index: {}]
  %s6 = sld [smem:[#allocation0]]
  $region30: #{se_layer.1} parent=0
    _
  %s8 = ssub.s32 1, %s6
  %s9 = scalar_select 0, %s8, %s6
  // Predicated region
  $region2: #{se_layer.1} parent=0 // pred_check
    _
  $region3: #{se_layer.1} parent=0 // pred_check_branch
    %11 = sbr.rel (0) target = $region5
  $region4: #{se_layer.1} parent=0 // pred_region
    _
  $region5: #{se_layer.1} parent=0 // pred_fallthru
    _
  // Predicated region
  $region6: #{se_layer.1} parent=0 // pred_check
    _
  $region7: #{se_layer.1} parent=0 // pred_check_branch
    %13 = sbr.rel (0) target = $region9
  $region8: #{se_layer.1} parent=0 // pred_region
    _
  $region9: #{se_layer.1} parent=0 // pred_fallthru
    _
  // Predicated region
  $region10: #{se_layer.1} parent=0 // pred_check
    _
  $region11: #{se_layer.1} parent=0 // pred_check_branch
    %15 = sbr.rel (0) target = $region13
  $region12: #{se_layer.1} parent=0 // pred_region
    _
  $region13: #{se_layer.1} parent=0 // pred_fallthru
    _
  // Predicated region
  $region14: #{se_layer.1} parent=0 // pred_check
    _
  $region15: #{se_layer.1} parent=0 // pred_check_branch
    %17 = sbr.rel (0) target = $region17
  $region16: #{se_layer.1} parent=0 // pred_region
    _
  $region17: #{se_layer.1} parent=0 // pred_fallthru
    _
  // Predicated region
  $region18: #{se_layer.1} parent=0 // pred_check
    _
  $region19: #{se_layer.1} parent=0 // pred_check_branch
    %19 = sbr.rel (0) target = $region21
  $region20: #{se_layer.1} parent=0 // pred_region
    _
  $region21: #{se_layer.1} parent=0 // pred_fallthru
    _
  %v20 = vld [vmem:[%s0] sm:$0xff]
  %v21 = vld [vmem:[%s0 + $0x8] sm:$0xff]
  %v22 = vld [vmem:[%s0 + $0x10] sm:$0xff]
  %v23 = vld [vmem:[%s0 + $0x18] sm:$0xff]
  %v24 = vld [vmem:[%s0 + $0x20] sm:$0xff]
  %v25 = vld [vmem:[%s0 + $0x28] sm:$0xff]
  %v26 = vld [vmem:[%s0 + $0x30] sm:$0xff]
  %v27 = vld [vmem:[%s0 + $0x38] sm:$0xff]
  %v28 = vld [vmem:[%s0 + $0x40] sm:$0xff]
  %v29 = vld [vmem:[%s0 + $0x48] sm:$0xff]
  %v30 = vld [vmem:[%s0 + $0x50] sm:$0xff]
  %v31 = vld [vmem:[%s0 + $0x58] sm:$0xff]
  %v32 = vld [vmem:[%s0 + $0x60] sm:$0xff]
  %v33 = vld [vmem:[%s0 + $0x68] sm:$0xff]
  %v34 = vld [vmem:[%s0 + $0x70] sm:$0xff]
  %v35 = vld [vmem:[%s0 + $0x78] sm:$0xff]
  %v36 = vadd.f32 %v20, %v21
  %37 = vadd.xlane.f32.xlu0 %v36
  %v38 = vpop.xlane.xlu0 %37
  %v39 = vadd.f32 %v22, %v23
  %40 = vadd.xlane.f32.xlu0 %v39
  %v41 = vpop.xlane.xlu0 %40
  %v42 = vadd.f32 %v24, %v25
  %43 = vadd.xlane.f32.xlu0 %v42
  %v44 = vpop.xlane.xlu0 %43
  %v45 = vadd.f32 %v26, %v27
  %46 = vadd.xlane.f32.xlu0 %v45
  %v47 = vpop.xlane.xlu0 %46
  %v48 = vadd.f32 %v28, %v29
  %49 = vadd.xlane.f32.xlu0 %v48
  %v50 = vpop.xlane.xlu0 %49
  %v51 = vadd.f32 %v30, %v31
  %52 = vadd.xlane.f32.xlu0 %v51
  %v53 = vpop.xlane.xlu0 %52
  %v54 = vadd.f32 %v32, %v33
  %55 = vadd.xlane.f32.xlu0 %v54
  %v56 = vpop.xlane.xlu0 %55
  %v57 = vadd.f32 %v34, %v35
  %58 = vadd.xlane.f32.xlu0 %v57
  %v59 = vpop.xlane.xlu0 %58
  %v60 = vmul.f32 %v38, 0.00390625
  %v61 = vmul.f32 %v41, 0.00390625
  %v62 = vmul.f32 %v44, 0.00390625
  %v63 = vmul.f32 %v47, 0.00390625
  %v64 = vmul.f32 %v50, 0.00390625
  %v65 = vmul.f32 %v53, 0.00390625
  %v66 = vmul.f32 %v56, 0.00390625
  %v67 = vmul.f32 %v59, 0.00390625
  %v68 = vld [vmem:[%s1] sm:$0xff]
  %v69 = vld [vmem:[%s1 + $0x8] sm:$0xff]
  %v70 = vld [vmem:[%s1 + $0x10] sm:$0xff]
  %v71 = vld [vmem:[%s1 + $0x18] sm:$0xff]
  %v72 = vld [vmem:[%s2] sm:$0x1]
  %v74 = vlaneseq
  %v75 = vshrl.u32 %v74, 7
  %v76 = vsub.s32 0, %v75
  %v77 = vrot.slane %v72, %v76
  %v87 = vlaneseq
  %v88 = vand.u32 %v87, 127
  %v89 = vlaneseq
  %v90 = vshrl.u32 %v89, 7
  %v91 = vsub.s32 %v88, %v90
  %v92 = vrot.slane %v60, %v91
  %v93 = vadd.s32 %v88, 4294967288
  %v94 = vlaneseq
  %v95 = vshrl.u32 %v94, 7
  %v96 = vsub.s32 %v93, %v95
  %v97 = vrot.slane %v61, %v96
  %vm98 = vcmask 130112
  %v99 = vsel %vm98, %v97, %v92
  %v100 = vadd.s32 %v88, 4294967280
  %v101 = vlaneseq
  %v102 = vshrl.u32 %v101, 7
  %v103 = vsub.s32 %v100, %v102
  %v104 = vrot.slane %v62, %v103
  %vm105 = vcmask 195712
  %v106 = vsel %vm105, %v104, %v99
  %v107 = vadd.s32 %v88, 4294967272
  %v108 = vlaneseq
  %v109 = vshrl.u32 %v108, 7
  %v110 = vsub.s32 %v107, %v109
  %v111 = vrot.slane %v63, %v110
  %vm112 = vcmask 261312
  %v113 = vsel %vm112, %v111, %v106
  %v114 = vlaneseq
  %v115 = vshrl.u32 %v114, 7
  %v116 = vsub.s32 %v88, %v115
  %v117 = vrot.slane %v64, %v116
  %v118 = vlaneseq
  %v119 = vshrl.u32 %v118, 7
  %v120 = vsub.s32 %v93, %v119
  %v121 = vrot.slane %v65, %v120
  %v122 = vsel %vm98, %v121, %v117
  %v123 = vlaneseq
  %v124 = vshrl.u32 %v123, 7
  %v125 = vsub.s32 %v100, %v124
  %v126 = vrot.slane %v66, %v125
  %v127 = vsel %vm105, %v126, %v122
  %v128 = vlaneseq
  %v129 = vshrl.u32 %v128, 7
  %v130 = vsub.s32 %v107, %v129
  %v131 = vrot.slane %v67, %v130
  %v132 = vsel %vm112, %v131, %v127
  %vm133 = vcmask 1041409
  %v134 = vsel %vm133, %v132, %v113
  %vm135 = vcmask 261120
  %v136 = vsel %vm135, %v134, 0
  %138 = vmatprep.subr.mxu0 0.0
  %139 = vmatpush1.msra.mxu0 %v68
  %140 = vmatprep.subr.mxu0 0.0
  %141 = vmatpush1.msra.mxu0 %v69
  %142 = vmatprep.subr.mxu0 0.0
  %143 = vmatpush1.msra.mxu0 %v70
  %144 = vmatprep.subr.mxu0 0.0
  %145 = vmatpush1.msra.mxu0 %v71
  %146 = vmatprep.subr.mxu0 0.0
  %147 = vmatpush1.msra.mxu0 0.0
  %148 = vmatprep.subr.mxu0 0.0
  %149 = vmatpush1.msra.mxu0 0.0
  %150 = vmatprep.subr.mxu0 0.0
  %151 = vmatpush1.msra.mxu0 0.0
  %152 = vmatprep.subr.mxu0 0.0
  %153 = vmatpush1.msra.mxu0 0.0
  %154 = vmatprep.subr.mxu0 0.0
  %155 = vmatpush1.msra.mxu0 0.0
  %156 = vmatprep.subr.mxu0 0.0
  %157 = vmatpush1.msra.mxu0 0.0
  %158 = vmatprep.subr.mxu0 0.0
  %159 = vmatpush1.msra.mxu0 0.0
  %160 = vmatprep.subr.mxu0 0.0
  %161 = vmatpush1.msra.mxu0 0.0
  %162 = vmatprep.subr.mxu0 0.0
  %163 = vmatpush1.msra.mxu0 0.0
  %164 = vmatprep.subr.mxu0 0.0
  %165 = vmatpush1.msra.mxu0 0.0
  %166 = vmatprep.subr.mxu0 0.0
  %167 = vmatpush1.msra.mxu0 0.0
  %168 = vmatprep.subr.mxu0 0.0
  %169 = vmatpush1.msra.mxu0 0.0
  %170 = vmatprep.subr.mxu0 0.0
  %171 = vmatpush1.msra.mxu0 0.0
  %172 = vmatprep.subr.mxu0 0.0
  %173 = vmatpush1.msra.mxu0 0.0
  %174 = vmatprep.subr.mxu0 0.0
  %175 = vmatpush1.msra.mxu0 0.0
  %176 = vmatprep.subr.mxu0 0.0
  %177 = vmatpush1.msra.mxu0 0.0
  %178 = vmatprep.subr.mxu0 0.0
  %179 = vmatpush1.msra.mxu0 0.0
  %180 = vmatprep.subr.mxu0 0.0
  %181 = vmatpush1.msra.mxu0 0.0
  %182 = vmatprep.subr.mxu0 0.0
  %183 = vmatpush1.msra.mxu0 0.0
  %184 = vmatprep.subr.mxu0 0.0
  %185 = vmatpush1.msra.mxu0 0.0
  %186 = vmatprep.subr.mxu0 0.0
  %187 = vmatpush1.msra.mxu0 0.0
  %188 = vmatprep.subr.mxu0 0.0
  %189 = vmatpush1.msra.mxu0 0.0
  %190 = vmatprep.subr.mxu0 0.0
  %191 = vmatpush1.msra.mxu0 0.0
  %192 = vmatprep.subr.mxu0 0.0
  %193 = vmatpush1.msra.mxu0 0.0
  %194 = vmatprep.subr.mxu0 0.0
  %195 = vmatpush1.msra.mxu0 0.0
  %196 = vmatprep.subr.mxu0 0.0
  %197 = vmatpush1.msra.mxu0 0.0
  %198 = vmatprep.subr.mxu0 0.0
  %199 = vmatpush1.msra.mxu0 0.0
  %200 = vmatprep.subr.mxu0 0.0
  %201 = vmatpush1.msra.mxu0 0.0
  %202 = vmatprep.mubr.f32.mxu0 0.0
  %203 = vmatmul.mubr.f32.gmra.mrb[0].mxu0 %v136
  %v204 = vpop.f32.mrb[0].mxu0
  %v205 = vadd.f32 %v77, %v204
  %v206 = vpop.f32.mrb[0].mxu0
  %207 = vdwg.mxu0
  %v208 = vmax.f32 %v205, 0.0
  %v209 = vld [vmem:[%s3] sm:$0x3]
  %v210 = vld [vmem:[%s4] sm:$0x1]
  %v212 = vlaneseq
  %v213 = vshrl.u32 %v212, 7
  %v214 = vsub.s32 0, %v213
  %v215 = vrot.slane %v210, %v214
  %vm217 = vcmask 15360
  %v219 = vsel %vm217, %v208, 0
  %vm221 = vcmask 1041408
  %v223 = vsel %vm221, %v209, 0
  %225 = vmatprep.subr.mxu0 0.0
  %226 = vmatpush1.msra.mxu0 %v223
  %227 = vmatprep.subr.mxu0 0.0
  %228 = vmatpush1.msra.mxu0 0.0
  %229 = vmatprep.subr.mxu0 0.0
  %230 = vmatpush1.msra.mxu0 0.0
  %231 = vmatprep.subr.mxu0 0.0
  %232 = vmatpush1.msra.mxu0 0.0
  %233 = vmatprep.subr.mxu0 0.0
  %234 = vmatpush1.msra.mxu0 0.0
  %235 = vmatprep.subr.mxu0 0.0
  %236 = vmatpush1.msra.mxu0 0.0
  %237 = vmatprep.subr.mxu0 0.0
  %238 = vmatpush1.msra.mxu0 0.0
  %239 = vmatprep.subr.mxu0 0.0
  %240 = vmatpush1.msra.mxu0 0.0
  %241 = vmatprep.subr.mxu0 0.0
  %242 = vmatpush1.msra.mxu0 0.0
  %243 = vmatprep.subr.mxu0 0.0
  %244 = vmatpush1.msra.mxu0 0.0
  %245 = vmatprep.subr.mxu0 0.0
  %246 = vmatpush1.msra.mxu0 0.0
  %247 = vmatprep.subr.mxu0 0.0
  %248 = vmatpush1.msra.mxu0 0.0
  %249 = vmatprep.subr.mxu0 0.0
  %250 = vmatpush1.msra.mxu0 0.0
  %251 = vmatprep.subr.mxu0 0.0
  %252 = vmatpush1.msra.mxu0 0.0
  %253 = vmatprep.subr.mxu0 0.0
  %254 = vmatpush1.msra.mxu0 0.0
  %255 = vmatprep.subr.mxu0 0.0
  %256 = vmatpush1.msra.mxu0 0.0
  %257 = vmatprep.subr.mxu0 0.0
  %258 = vmatpush1.msra.mxu0 0.0
  %259 = vmatprep.subr.mxu0 0.0
  %260 = vmatpush1.msra.mxu0 0.0
  %261 = vmatprep.subr.mxu0 0.0
  %262 = vmatpush1.msra.mxu0 0.0
  %263 = vmatprep.subr.mxu0 0.0
  %264 = vmatpush1.msra.mxu0 0.0
  %265 = vmatprep.subr.mxu0 0.0
  %266 = vmatpush1.msra.mxu0 0.0
  %267 = vmatprep.subr.mxu0 0.0
  %268 = vmatpush1.msra.mxu0 0.0
  %269 = vmatprep.subr.mxu0 0.0
  %270 = vmatpush1.msra.mxu0 0.0
  %271 = vmatprep.subr.mxu0 0.0
  %272 = vmatpush1.msra.mxu0 0.0
  %273 = vmatprep.subr.mxu0 0.0
  %274 = vmatpush1.msra.mxu0 0.0
  %275 = vmatprep.subr.mxu0 0.0
  %276 = vmatpush1.msra.mxu0 0.0
  %277 = vmatprep.subr.mxu0 0.0
  %278 = vmatpush1.msra.mxu0 0.0
  %279 = vmatprep.subr.mxu0 0.0
  %280 = vmatpush1.msra.mxu0 0.0
  %281 = vmatprep.subr.mxu0 0.0
  %282 = vmatpush1.msra.mxu0 0.0
  %283 = vmatprep.subr.mxu0 0.0
  %284 = vmatpush1.msra.mxu0 0.0
  %285 = vmatprep.subr.mxu0 0.0
  %286 = vmatpush1.msra.mxu0 0.0
  %287 = vmatprep.subr.mxu0 0.0
  %288 = vmatpush1.msra.mxu0 0.0
  %289 = vmatprep.mubr.f32.mxu0 0.0
  %290 = vmatmul.mubr.f32.gmra.mrb[0].mxu0 %v219
  %v291 = vpop.f32.mrb[0].mxu0
  %v292 = vadd.f32 %v215, %v291
  %v293 = vpop.f32.mrb[0].mxu0
  %294 = vdwg.mxu0
  %v295 = vxor.u32 %v292, 2147483648
  %v296 = vmul.f32 %v295, 1.442695
  %v297 = vpow.pop %v296
  %v298 = vadd.f32 %v297, 1.0
  %v299 = vrcp.pop %v298
  %v300 = vmul.f32 1.0, %v299
  %v301 = vlaneseq
  %v302 = vshrl.u32 %v301, 7
  %v303 = vsub.s32 0, %v302
  %v304 = vrot.slane %v300, %v303
  %306 = vbcast.lane.b32.xlu0 %v304, 256
  %v307 = vpop.permute.xlu0 %306
  %s309 = sor.u32 256, 8
  %310 = vbcast.lane.b32.xlu0 %v304, %s309
  %v311 = vpop.permute.xlu0 %310
  %s313 = sor.u32 256, 16
  %314 = vbcast.lane.b32.xlu0 %v304, %s313
  %v315 = vpop.permute.xlu0 %314
  %s317 = sor.u32 256, 24
  %318 = vbcast.lane.b32.xlu0 %v304, %s317
  %v319 = vpop.permute.xlu0 %318
  %v320 = vlaneseq
  %v321 = vshrl.u32 %v320, 7
  %v322 = vsub.s32 1, %v321
  %v323 = vrot.slane %v300, %v322
  %325 = vbcast.lane.b32.xlu0 %v323, 256
  %v326 = vpop.permute.xlu0 %325
  %s328 = sor.u32 256, 8
  %329 = vbcast.lane.b32.xlu0 %v323, %s328
  %v330 = vpop.permute.xlu0 %329
  %s332 = sor.u32 256, 16
  %333 = vbcast.lane.b32.xlu0 %v323, %s332
  %v334 = vpop.permute.xlu0 %333
  %s336 = sor.u32 256, 24
  %337 = vbcast.lane.b32.xlu0 %v323, %s336
  %v338 = vpop.permute.xlu0 %337
  %v339 = vmul.f32 %v20, %v307
  %v340 = vmul.f32 %v21, %v307
  %v341 = vmul.f32 %v22, %v311
  %v342 = vmul.f32 %v23, %v311
  %v343 = vmul.f32 %v24, %v315
  %v344 = vmul.f32 %v25, %v315
  %v345 = vmul.f32 %v26, %v319
  %v346 = vmul.f32 %v27, %v319
  %v347 = vmul.f32 %v28, %v326
  %v348 = vmul.f32 %v29, %v326
  %v349 = vmul.f32 %v30, %v330
  %v350 = vmul.f32 %v31, %v330
  %v351 = vmul.f32 %v32, %v334
  %v352 = vmul.f32 %v33, %v334
  %v353 = vmul.f32 %v34, %v338
  %v354 = vmul.f32 %v35, %v338
  %355 = vst [vmem:[%s5] sm:$0xff] %v339
  %356 = vst [vmem:[%s5 + $0x8] sm:$0xff] %v340
  %357 = vst [vmem:[%s5 + $0x10] sm:$0xff] %v341
  %358 = vst [vmem:[%s5 + $0x18] sm:$0xff] %v342
  %359 = vst [vmem:[%s5 + $0x20] sm:$0xff] %v343
  %360 = vst [vmem:[%s5 + $0x28] sm:$0xff] %v344
  %361 = vst [vmem:[%s5 + $0x30] sm:$0xff] %v345
  %362 = vst [vmem:[%s5 + $0x38] sm:$0xff] %v346
  %363 = vst [vmem:[%s5 + $0x40] sm:$0xff] %v347
  %364 = vst [vmem:[%s5 + $0x48] sm:$0xff] %v348
  %365 = vst [vmem:[%s5 + $0x50] sm:$0xff] %v349
  %366 = vst [vmem:[%s5 + $0x58] sm:$0xff] %v350
  %367 = vst [vmem:[%s5 + $0x60] sm:$0xff] %v351
  %368 = vst [vmem:[%s5 + $0x68] sm:$0xff] %v352
  %369 = vst [vmem:[%s5 + $0x70] sm:$0xff] %v353
  %370 = vst [vmem:[%s5 + $0x78] sm:$0xff] %v354
  // Predicated region
  $region22: #{se_layer.1} parent=0 // pred_check
    _
  $region23: #{se_layer.1} parent=0 // pred_check_branch
    %372 = sbr.rel (0) target = $region25
  $region24: #{se_layer.1} parent=0 // pred_region
    _
  $region25: #{se_layer.1} parent=0 // pred_fallthru
    _
  // Predicated region
  $region26: #{se_layer.1} parent=0 // pred_check
    _
  $region27: #{se_layer.1} parent=0 // pred_check_branch
    %374 = sbr.rel (0) target = $region29
  $region28: #{se_layer.1} parent=0 // pred_region
    _
  $region29: #{se_layer.1} parent=0 // pred_fallthru
    _

</llo_original>
